<compile_context>
chip_gen: v7x
topology: tpu7x:2x2x1
jax: 0.10.0
libtpu: 0.0.40
codegen_flags: <defaults>
</compile_context>

<pallas_src>
import functools

import jax
import jax.numpy as jnp
from jax.experimental import pallas as pl
from jax.experimental.pallas import tpu as pltpu


def _round_up(x, m):
    return ((x + m - 1) // m) * m


def feature_embedder_kernel(
    dscal_ref,    # SMEM (2,)        [sigmoid(date_params[0]), date_params[1]]
    packed_ref,   # (TB, P)    f32   [nums | date | cats-as-f32]
    cat_tab_ref,  # (NC*CATP, H_p) bf16  folded (embedding -> BN -> Linear1) tables
    w_nh_ref,     # (Nn, H_p)  f32   folded (num-emb Linear -> BN -> Linear1)
    w_dh_ref,     # (1, H_p)   f32   folded date column of the same
    b1_ref,       # (1, H_p)   f32   folded bias (b1 + shift_cat@w1c + num bias path)
    w2_ref,       # (H_p, H_p) bf16  second weight-norm Linear
    b2_ref,       # (1, H_p)   f32
    out_ref,      # (TB, H_p)  bf16 (or f32)
    *, n_num, n_cat, catp,
):
    f32 = jnp.float32
    tb = packed_ref.shape[0]

    nums = jnp.nan_to_num(packed_ref[:, :n_num])                      # (TB, Nn)
    date = jnp.nan_to_num(packed_ref[:, n_num:n_num + 1])             # (TB, 1)

    # date transform: d = w * cos(p1 * date) + (1 - w) * date  (scalars from SMEM)
    w = dscal_ref[0]
    p1 = dscal_ref[1]
    d = w * jnp.cos(p1 * date) + (1.0 - w) * date                     # (TB, 1)

    # Numerical path: K = Nn (~5) contraction as rank-1 VPU updates over H_p lanes
    # (no MXU pass, no (TB, Dn_pad) intermediate, stays in f32).
    h = b1_ref[...] + d * w_dh_ref[...]                               # (TB, H_p)
    wnh = w_nh_ref[...]
    for k in range(n_num):                                            # static unroll
        h = h + nums[:, k:k + 1] * wnh[k:k + 1, :]

    # Categorical path: in-kernel gather of the folded tables via one-hot MXU matmul.
    kdim = n_cat * catp
    cats_i = packed_ref[:, n_num + 1:n_num + 1 + n_cat].astype(jnp.int32)
    iota = jax.lax.broadcasted_iota(jnp.int32, (tb, kdim), 1)
    onehot = iota == cats_i[:, 0:1]
    for j in range(1, n_cat):
        onehot = jnp.logical_or(onehot, iota == cats_i[:, j:j + 1] + j * catp)
    h = h + jnp.dot(onehot.astype(jnp.bfloat16), cat_tab_ref[...],
                    preferred_element_type=f32)

    h = jnp.maximum(h, 0.0)                                           # ReLU

    # Second weight-norm Linear (bf16 MXU inputs, f32 accumulation).
    out_ref[...] = (jnp.dot(h.astype(jnp.bfloat16), w2_ref[...],
                            preferred_element_type=f32)
                    + b2_ref[...]).astype(out_ref.dtype)


def _fold_weight_norm(v, g):
    # v: (in, out); g: (out,).  PyTorch weight_norm (dim=0 over the (out, in)
    # weight) normalises each output row -> here each output column.
    norm = jnp.sqrt(jnp.sum(v * v, axis=0, keepdims=True))
    return v / norm * g[None, :]


class FeatureEmbedderPallas:
    """JAX/Pallas re-implementation of the PyTorch FeatureEmbedder (eval mode)."""

    LANE = 128

    def __init__(self, num_categorical, num_numerical, num_categories,
                 emb_dim=32, hidden_dim=256, feature_dropout=0.1, key=None,
                 batch_tile_target=1024, out_dtype=jnp.bfloat16):
        self.hidden_dim = hidden_dim
        self.num_categorical = num_categorical
        self.num_numerical = num_numerical
        self.emb_dim = emb_dim
        self.batch_tile_target = batch_tile_target
        self.out_dtype = out_dtype

        # TODO(synk): num_categorical == 0 branch (no categorical embedding) not implemented.
        Dc = num_categorical * emb_dim
        Dn = (num_numerical + 1) * emb_dim
        D = Dc + Dn
        H = hidden_dim
        self.Dc, self.Dn, self.H = Dc, Dn, H
        self.H_pad = _round_up(H, self.LANE)

        key = jax.random.PRNGKey(0) if key is None else key
        ks = jax.random.split(key, 10)

        # nn.Embedding(num_categories, emb_dim): N(0, 1) init.
        self.emb_table = jax.random.normal(ks[0], (num_categories, emb_dim),
                                           dtype=jnp.float32)

        # num_embedding Linear: (num_numerical+1) -> Dn, stored as (in, out).
        fan_in = num_numerical + 1
        bnd = 1.0 / jnp.sqrt(fan_in)
        w_num = jax.random.uniform(ks[1], (fan_in, Dn), jnp.float32, -bnd, bnd)
        self.wn_num = w_num[:num_numerical]                  # (Nn, Dn)
        self.wn_date = w_num[num_numerical:]                 # (1, Dn)
        self.bn_num = jax.random.uniform(ks[2], (1, Dn), jnp.float32, -bnd, bnd)

        # date_params (same init as torch.Tensor([0, 1])).
        self.date_params = jnp.array([0.0, 1.0], dtype=jnp.float32)

        # BatchNorm1d(D), eval mode; non-trivial deterministic stats/affine.
        eps = 1e-5
        gamma = 1.0 + 0.1 * jax.random.normal(ks[3], (D,), jnp.float32)
        beta = 0.1 * jax.random.normal(ks[4], (D,), jnp.float32)
        running_mean = 0.1 * jax.random.normal(ks[5], (D,), jnp.float32)
        running_var = 1.0 + 0.1 * jax.random.uniform(ks[6], (D,), jnp.float32)
        scale = gamma / jnp.sqrt(running_var + eps)
        shift = beta - running_mean * scale
        self.scale_cat = scale[None, :Dc]
        self.shift_cat = shift[None, :Dc]
        self.scale_num = scale[None, Dc:]
        self.shift_num = shift[None, Dc:]

        # weight_norm(Linear(D, H)) folded.
        bnd1 = 1.0 / jnp.sqrt(D)
        v1 = jax.random.uniform(ks[7], (D, H), jnp.float32, -bnd1, bnd1)
        g1 = 1.0 + 0.1 * jax.random.uniform(ks[7], (H,), jnp.float32)
        w1 = _fold_weight_norm(v1, g1)
        self.w1c = w1[:Dc]                                   # (Dc, H)
        self.w1n = w1[Dc:]                                   # (Dn, H)
        self.b1 = jax.random.uniform(ks[8], (1, H), jnp.float32, -bnd1, bnd1)

        # weight_norm(Linear(H, H)) folded.
        bnd2 = 1.0 / jnp.sqrt(H)
        v2 = jax.random.uniform(ks[9], (H, H), jnp.float32, -bnd2, bnd2)
        g2 = 1.0 + 0.1 * jax.random.uniform(ks[9], (H,), jnp.float32)
        self.w2 = _fold_weight_norm(v2, g2)
        self.b2 = jax.random.uniform(ks[9], (1, H), jnp.float32, -bnd2, bnd2)

        # TODO(synk): nn.Dropout(0.1) is identity in eval mode; training-mode
        # dropout / batch-statistics BatchNorm / scale_grad_by_freq not implemented.

        # ---------------- kernel-side folded / padded parameters ----------------
        H_pad = self.H_pad

        def pad_cols(x):
            return jnp.pad(x, ((0, 0), (0, H_pad - x.shape[1])))

        # Numerical path fold: num-emb Linear -> BN(num) -> first Linear is one
        # linear map (no nonlinearity in between), so contract it offline.
        W_nh = (self.wn_num * self.scale_num) @ self.w1n        # (Nn, H)
        w_dh = (self.wn_date * self.scale_num) @ self.w1n       # (1, H)
        b1_eff = (self.b1
                  + self.shift_cat @ self.w1c
                  + (self.bn_num * self.scale_num + self.shift_num) @ self.w1n)

        # Categorical path fold: embedding -> BN(cat) -> first Linear collapses to
        # one (num_categories -> H) table per categorical slot.
        E = emb_dim
        self.CATP = _round_up(num_categories, 8)
        tabs = []
        for j in range(num_categorical):
            Mj = (self.scale_cat[0, j * E:(j + 1) * E][:, None]
                  * self.w1c[j * E:(j + 1) * E, :])              # (E, H)
            Tj = self.emb_table @ Mj                             # (num_categories, H)
            tabs.append(jnp.pad(Tj, ((0, self.CATP - num_categories),
                                     (0, H_pad - H))))
        self.k_cat_tab = jnp.concatenate(tabs, axis=0).astype(jnp.bfloat16)

        self.k_w_nh = pad_cols(W_nh)                             # f32 (Nn, H_pad)
        self.k_w_dh = pad_cols(w_dh)                             # f32 (1, H_pad)
        self.k_b1 = pad_cols(b1_eff)                             # f32 (1, H_pad)
        self.k_w2 = jnp.pad(self.w2, ((0, H_pad - H),
                                      (0, H_pad - H))).astype(jnp.bfloat16)
        self.k_b2 = pad_cols(self.b2)                            # f32 (1, H_pad)

    # ------------------------------------------------------------------ forward
    def __call__(self, feats):
        B = feats["date"].shape[0]
        if B == 0:
            return jnp.zeros((0, self.H), dtype=self.out_dtype)

        # Pack [nums | date | cats] into a single f32 row stream.  Category ids
        # are small ints, exactly representable in f32 (cast back to int32 in-kernel).
        cats = feats["cat"].astype(jnp.float32)
        nums = feats["num"].astype(jnp.float32)
        dates = feats["date"].astype(jnp.float32).reshape(B, 1)
        packed = jnp.concatenate([nums, dates, cats], axis=1)   # (B, P)
        P = packed.shape[1]

        dscal = jnp.stack([jax.nn.sigmoid(self.date_params[0]),
                           self.date_params[1]]).astype(jnp.float32)

        # Batch tiling derived from the grid: ~batch_tile_target rows per step,
        # and >= 2 grid steps when the batch allows (v7x megacore sharding).
        B8 = _round_up(B, 8)
        n_tiles = max(1, pl.cdiv(B8, self.batch_tile_target))
        if B8 >= 16:
            n_tiles = max(2, n_tiles)
        TB = _round_up(pl.cdiv(B8, n_tiles), 8)
        B_pad = n_tiles * TB

        packed_p = jnp.pad(packed, ((0, B_pad - B), (0, 0)))

        def row_spec(c):   # batch-tiled activation
            return pl.BlockSpec((TB, c), lambda i: (i, 0))

        def w_spec(r, c):  # resident weight (same block every grid step)
            return pl.BlockSpec((r, c), lambda i: (0, 0))

        smem_spec = pl.BlockSpec((2,), lambda i: (0,),
                                 memory_space=pltpu.MemorySpace.SMEM)

        kernel = functools.partial(feature_embedder_kernel,
                                   n_num=self.num_numerical,
                                   n_cat=self.num_categorical,
                                   catp=self.CATP)

        out = pl.pallas_call(
            kernel,
            out_shape=jax.ShapeDtypeStruct((B_pad, self.H_pad), self.out_dtype),
            grid=(n_tiles,),
            in_specs=[
                smem_spec,                                            # dscal
                row_spec(P),                                          # packed rows
                w_spec(self.num_categorical * self.CATP, self.H_pad), # cat tables
                w_spec(self.num_numerical, self.H_pad),               # W_nh
                w_spec(1, self.H_pad),                                # w_dh
                w_spec(1, self.H_pad),                                # b1 (folded)
                w_spec(self.H_pad, self.H_pad),                       # w2 (bf16)
                w_spec(1, self.H_pad),                                # b2
            ],
            out_specs=row_spec(self.H_pad),
            compiler_params=pltpu.CompilerParams(
                dimension_semantics=("parallel",)),
        )(dscal, packed_p, self.k_cat_tab, self.k_w_nh, self.k_w_dh,
          self.k_b1, self.k_w2, self.k_b2)

        return out[:B, :self.H]

    # --------------------------------------------------------------- reference
    def reference(self, feats):
        """Pure-JAX f32 reference with identical (unfolded) parameters."""
        B = feats["date"].shape[0]
        if B == 0:
            return jnp.zeros((0, self.H), dtype=jnp.float32)
        cats, nums, dates = feats["cat"], feats["num"], feats["date"]
        nums = jnp.nan_to_num(nums.astype(jnp.float32))
        dates = jnp.nan_to_num(dates.astype(jnp.float32)).reshape(B, 1)
        cat_emb = jnp.take(self.emb_table, cats, axis=0).reshape(B, self.Dc)
        w = jax.nn.sigmoid(self.date_params[0])
        p1 = self.date_params[1]
        d = w * jnp.cos(p1 * dates) + (1.0 - w) * dates
        num_emb = nums @ self.wn_num + d * self.wn_date + self.bn_num
        x_cat = cat_emb * self.scale_cat + self.shift_cat
        x_num = num_emb * self.scale_num + self.shift_num
        h = jnp.maximum(x_cat @ self.w1c + x_num @ self.w1n + self.b1, 0.0)
        return h @ self.w2 + self.b2


if __name__ == "__main__":
    B = 8
    num_categorical, num_numerical, num_categories = 3, 5, 11
    emb_dim, hidden_dim = 32, 64

    key = jax.random.PRNGKey(0)
    k_model, k_cat, k_num, k_date = jax.random.split(key, 4)

    model = FeatureEmbedderPallas(num_categorical, num_numerical, num_categories,
                                  emb_dim=emb_dim, hidden_dim=hidden_dim,
                                  key=k_model)

    cats = jax.random.randint(k_cat, (B, num_categorical), 0, num_categories,
                              dtype=jnp.int32)
    nums = jax.random.normal(k_num, (B, num_numerical), dtype=jnp.float32)
    nums = nums.at[0, 0].set(jnp.nan)          # exercise nan_to_num
    dates = jax.random.normal(k_date, (B,), dtype=jnp.float32)
    dates = dates.at[1].set(jnp.nan)           # exercise nan_to_num

    feats = {"cat": cats, "num": nums, "date": dates}

    out = jax.block_until_ready(model(feats))
    ref = model.reference(feats)

    assert out.shape == (B, hidden_dim)
    assert bool(jnp.all(jnp.isfinite(out.astype(jnp.float32))))
    # bf16 tables / MXU inputs / bf16 output with f32 accumulation ->
    # compare against the f32 reference at a bf16-appropriate tolerance.
    assert bool(jnp.allclose(out.astype(jnp.float32), ref, atol=2e-2, rtol=2e-2))
    print("KERNEL_OK")
</pallas_src>

<mosaic_0001>
module attributes {stable_mosaic.version = 11 : i64} {
  func.func @feature_embedder_kernel(%arg0: i32, %arg1: memref<2xf32, #tpu.memory_space<smem>>, %arg2: memref<8x9xf32, #tpu.memory_space<vmem>>, %arg3: memref<48x128xbf16, #tpu.memory_space<vmem>>, %arg4: memref<5x128xf32, #tpu.memory_space<vmem>>, %arg5: memref<1x128xf32, #tpu.memory_space<vmem>>, %arg6: memref<1x128xf32, #tpu.memory_space<vmem>>, %arg7: memref<128x128xbf16, #tpu.memory_space<vmem>>, %arg8: memref<1x128xf32, #tpu.memory_space<vmem>>, %arg9: memref<8x128xbf16, #tpu.memory_space<vmem>>) attributes {dimension_semantics = [#tpu.dimension_semantics<parallel>], iteration_bounds = array<i64: 1>, scalar_prefetch = 0 : i64, scratch_operands = 0 : i64, tpu.core_type = #tpu.core_type<tc>, window_params = [{transform_indices = @transform_0, window_bounds = array<i64: 2>}, {transform_indices = @transform_1, window_bounds = array<i64: 8, 9>}, {pipeline_mode = #tpu.pipeline_mode<synchronous>, transform_indices = @transform_2, window_bounds = array<i64: 48, 128>}, {pipeline_mode = #tpu.pipeline_mode<synchronous>, transform_indices = @transform_3, window_bounds = array<i64: 5, 128>}, {pipeline_mode = #tpu.pipeline_mode<synchronous>, transform_indices = @transform_4, window_bounds = array<i64: 1, 128>}, {pipeline_mode = #tpu.pipeline_mode<synchronous>, transform_indices = @transform_5, window_bounds = array<i64: 1, 128>}, {pipeline_mode = #tpu.pipeline_mode<synchronous>, transform_indices = @transform_6, window_bounds = array<i64: 128, 128>}, {pipeline_mode = #tpu.pipeline_mode<synchronous>, transform_indices = @transform_7, window_bounds = array<i64: 1, 128>}, {transform_indices = @transform_8, window_bounds = array<i64: 8, 128>}]} {
    %c0 = arith.constant 0 : index
    %c0_0 = arith.constant 0 : index
    %0 = vector.load %arg2[%c0, %c0_0] : memref<8x9xf32, #tpu.memory_space<vmem>>, vector<8x5xf32>
    %1 = arith.cmpf one, %0, %0 : vector<8x5xf32>
    %cst = arith.constant 0.000000e+00 : f32
    %2 = vector.broadcast %cst : f32 to vector<8x5xf32>
    %3 = arith.select %1, %2, %0 : vector<8x5xi1>, vector<8x5xf32>
    %cst_1 = arith.constant 0x7F800000 : f32
    %4 = vector.broadcast %cst_1 : f32 to vector<8x5xf32>
    %5 = arith.cmpf oeq, %3, %4 : vector<8x5xf32>
    %cst_2 = arith.constant 3.40282347E+38 : f32
    %6 = vector.broadcast %cst_2 : f32 to vector<8x5xf32>
    %7 = arith.select %5, %6, %3 : vector<8x5xi1>, vector<8x5xf32>
    %cst_3 = arith.constant 0xFF800000 : f32
    %8 = vector.broadcast %cst_3 : f32 to vector<8x5xf32>
    %9 = arith.cmpf oeq, %7, %8 : vector<8x5xf32>
    %cst_4 = arith.constant -3.40282347E+38 : f32
    %10 = vector.broadcast %cst_4 : f32 to vector<8x5xf32>
    %11 = arith.select %9, %10, %7 : vector<8x5xi1>, vector<8x5xf32>
    %c0_5 = arith.constant 0 : index
    %c5 = arith.constant 5 : index
    %12 = vector.load %arg2[%c0_5, %c5] : memref<8x9xf32, #tpu.memory_space<vmem>>, vector<8x1xf32>
    %13 = arith.cmpf one, %12, %12 : vector<8x1xf32>
    %cst_6 = arith.constant 0.000000e+00 : f32
    %14 = vector.broadcast %cst_6 : f32 to vector<8x1xf32>
    %15 = arith.select %13, %14, %12 : vector<8x1xi1>, vector<8x1xf32>
    %cst_7 = arith.constant 0x7F800000 : f32
    %16 = vector.broadcast %cst_7 : f32 to vector<8x1xf32>
    %17 = arith.cmpf oeq, %15, %16 : vector<8x1xf32>
    %cst_8 = arith.constant 3.40282347E+38 : f32
    %18 = vector.broadcast %cst_8 : f32 to vector<8x1xf32>
    %19 = arith.select %17, %18, %15 : vector<8x1xi1>, vector<8x1xf32>
    %cst_9 = arith.constant 0xFF800000 : f32
    %20 = vector.broadcast %cst_9 : f32 to vector<8x1xf32>
    %21 = arith.cmpf oeq, %19, %20 : vector<8x1xf32>
    %cst_10 = arith.constant -3.40282347E+38 : f32
    %22 = vector.broadcast %cst_10 : f32 to vector<8x1xf32>
    %23 = arith.select %21, %22, %19 : vector<8x1xi1>, vector<8x1xf32>
    %c0_11 = arith.constant 0 : index
    %24 = memref.load %arg1[%c0_11] : memref<2xf32, #tpu.memory_space<smem>>
    %c1 = arith.constant 1 : index
    %25 = memref.load %arg1[%c1] : memref<2xf32, #tpu.memory_space<smem>>
    %26 = vector.broadcast %25 : f32 to vector<8x1xf32>
    %27 = arith.mulf %26, %23 : vector<8x1xf32>
    %28 = math.cos %27 : vector<8x1xf32>
    %29 = vector.broadcast %24 : f32 to vector<8x1xf32>
    %30 = arith.mulf %29, %28 : vector<8x1xf32>
    %cst_12 = arith.constant 1.000000e+00 : f32
    %31 = arith.subf %cst_12, %24 : f32
    %32 = vector.broadcast %31 : f32 to vector<8x1xf32>
    %33 = arith.mulf %32, %23 : vector<8x1xf32>
    %34 = arith.addf %30, %33 : vector<8x1xf32>
    %c0_13 = arith.constant 0 : index
    %c0_14 = arith.constant 0 : index
    %35 = vector.load %arg6[%c0_13, %c0_14] : memref<1x128xf32, #tpu.memory_space<vmem>>, vector<1x128xf32>
    %c0_15 = arith.constant 0 : index
    %c0_16 = arith.constant 0 : index
    %36 = vector.load %arg5[%c0_15, %c0_16] : memref<1x128xf32, #tpu.memory_space<vmem>>, vector<1x128xf32>
    %37 = vector.broadcast %34 : vector<8x1xf32> to vector<8x128xf32>
    %38 = vector.broadcast %36 : vector<1x128xf32> to vector<8x128xf32>
    %39 = arith.mulf %37, %38 : vector<8x128xf32>
    %40 = vector.broadcast %35 : vector<1x128xf32> to vector<8x128xf32>
    %41 = arith.addf %40, %39 : vector<8x128xf32>
    %c0_17 = arith.constant 0 : index
    %c0_18 = arith.constant 0 : index
    %42 = vector.load %arg4[%c0_17, %c0_18] : memref<5x128xf32, #tpu.memory_space<vmem>>, vector<5x128xf32>
    %43 = vector.extract_strided_slice %11 {offsets = [0, 0], sizes = [8, 1], strides = [1, 1]} : vector<8x5xf32> to vector<8x1xf32>
    %44 = vector.extract_strided_slice %42 {offsets = [0, 0], sizes = [1, 128], strides = [1, 1]} : vector<5x128xf32> to vector<1x128xf32>
    %45 = vector.broadcast %43 : vector<8x1xf32> to vector<8x128xf32>
    %46 = vector.broadcast %44 : vector<1x128xf32> to vector<8x128xf32>
    %47 = arith.mulf %45, %46 : vector<8x128xf32>
    %48 = arith.addf %41, %47 : vector<8x128xf32>
    %49 = vector.extract_strided_slice %11 {offsets = [0, 1], sizes = [8, 1], strides = [1, 1]} : vector<8x5xf32> to vector<8x1xf32>
    %50 = vector.extract_strided_slice %42 {offsets = [1, 0], sizes = [1, 128], strides = [1, 1]} : vector<5x128xf32> to vector<1x128xf32>
    %51 = vector.broadcast %49 : vector<8x1xf32> to vector<8x128xf32>
    %52 = vector.broadcast %50 : vector<1x128xf32> to vector<8x128xf32>
    %53 = arith.mulf %51, %52 : vector<8x128xf32>
    %54 = arith.addf %48, %53 : vector<8x128xf32>
    %55 = vector.extract_strided_slice %11 {offsets = [0, 2], sizes = [8, 1], strides = [1, 1]} : vector<8x5xf32> to vector<8x1xf32>
    %56 = vector.extract_strided_slice %42 {offsets = [2, 0], sizes = [1, 128], strides = [1, 1]} : vector<5x128xf32> to vector<1x128xf32>
    %57 = vector.broadcast %55 : vector<8x1xf32> to vector<8x128xf32>
    %58 = vector.broadcast %56 : vector<1x128xf32> to vector<8x128xf32>
    %59 = arith.mulf %57, %58 : vector<8x128xf32>
    %60 = arith.addf %54, %59 : vector<8x128xf32>
    %61 = vector.extract_strided_slice %11 {offsets = [0, 3], sizes = [8, 1], strides = [1, 1]} : vector<8x5xf32> to vector<8x1xf32>
    %62 = vector.extract_strided_slice %42 {offsets = [3, 0], sizes = [1, 128], strides = [1, 1]} : vector<5x128xf32> to vector<1x128xf32>
    %63 = vector.broadcast %61 : vector<8x1xf32> to vector<8x128xf32>
    %64 = vector.broadcast %62 : vector<1x128xf32> to vector<8x128xf32>
    %65 = arith.mulf %63, %64 : vector<8x128xf32>
    %66 = arith.addf %60, %65 : vector<8x128xf32>
    %67 = vector.extract_strided_slice %11 {offsets = [0, 4], sizes = [8, 1], strides = [1, 1]} : vector<8x5xf32> to vector<8x1xf32>
    %68 = vector.extract_strided_slice %42 {offsets = [4, 0], sizes = [1, 128], strides = [1, 1]} : vector<5x128xf32> to vector<1x128xf32>
    %69 = vector.broadcast %67 : vector<8x1xf32> to vector<8x128xf32>
    %70 = vector.broadcast %68 : vector<1x128xf32> to vector<8x128xf32>
    %71 = arith.mulf %69, %70 : vector<8x128xf32>
    %72 = arith.addf %66, %71 : vector<8x128xf32>
    %c0_19 = arith.constant 0 : index
    %c6 = arith.constant 6 : index
    %73 = vector.load %arg2[%c0_19, %c6] : memref<8x9xf32, #tpu.memory_space<vmem>>, vector<8x3xf32>
    %74 = arith.fptosi %73 : vector<8x3xf32> to vector<8x3xi32>
    %75 = tpu.iota {dimensions = array<i32: 1>} : vector<8x48xi32>
    %76 = vector.extract_strided_slice %74 {offsets = [0, 0], sizes = [8, 1], strides = [1, 1]} : vector<8x3xi32> to vector<8x1xi32>
    %77 = vector.broadcast %76 : vector<8x1xi32> to vector<8x48xi32>
    %78 = arith.cmpi eq, %75, %77 : vector<8x48xi32>
    %79 = vector.extract_strided_slice %74 {offsets = [0, 1], sizes = [8, 1], strides = [1, 1]} : vector<8x3xi32> to vector<8x1xi32>
    %c16_i32 = arith.constant 16 : i32
    %80 = vector.broadcast %c16_i32 : i32 to vector<8x1xi32>
    %81 = arith.addi %79, %80 : vector<8x1xi32>
    %82 = vector.broadcast %81 : vector<8x1xi32> to vector<8x48xi32>
    %83 = arith.cmpi eq, %75, %82 : vector<8x48xi32>
    %84 = arith.ori %78, %83 : vector<8x48xi1>
    %85 = vector.extract_strided_slice %74 {offsets = [0, 2], sizes = [8, 1], strides = [1, 1]} : vector<8x3xi32> to vector<8x1xi32>
    %c32_i32 = arith.constant 32 : i32
    %86 = vector.broadcast %c32_i32 : i32 to vector<8x1xi32>
    %87 = arith.addi %85, %86 : vector<8x1xi32>
    %88 = vector.broadcast %87 : vector<8x1xi32> to vector<8x48xi32>
    %89 = arith.cmpi eq, %75, %88 : vector<8x48xi32>
    %90 = arith.ori %84, %89 : vector<8x48xi1>
    %91 = arith.extui %90 : vector<8x48xi1> to vector<8x48xi32>
    %92 = arith.sitofp %91 : vector<8x48xi32> to vector<8x48xf32>
    %93 = arith.truncf %92 : vector<8x48xf32> to vector<8x48xbf16>
    %c0_20 = arith.constant 0 : index
    %c0_21 = arith.constant 0 : index
    %94 = vector.load %arg3[%c0_20, %c0_21] : memref<48x128xbf16, #tpu.memory_space<vmem>>, vector<48x128xbf16>
    %cst_22 = arith.constant dense<0.000000e+00> : vector<8x128xf32>
    %95 = tpu.matmul %93, %94, %cst_22 {dimension_numbers = #tpu.dot_dimension_numbers<[1], [0], [0], [1], [0, 0, 1, 1], [], []>} : vector<8x48xbf16>, vector<48x128xbf16>, vector<8x128xf32> -> vector<8x128xf32>
    %96 = arith.addf %72, %95 : vector<8x128xf32>
    %cst_23 = arith.constant 0.000000e+00 : f32
    %97 = vector.broadcast %cst_23 : f32 to vector<8x128xf32>
    %98 = arith.maximumf %96, %97 : vector<8x128xf32>
    %99 = arith.truncf %98 : vector<8x128xf32> to vector<8x128xbf16>
    %c0_24 = arith.constant 0 : index
    %c0_25 = arith.constant 0 : index
    %100 = vector.load %arg7[%c0_24, %c0_25] : memref<128x128xbf16, #tpu.memory_space<vmem>>, vector<128x128xbf16>
    %cst_26 = arith.constant dense<0.000000e+00> : vector<8x128xf32>
    %101 = tpu.matmul %99, %100, %cst_26 {dimension_numbers = #tpu.dot_dimension_numbers<[1], [0], [0], [1], [0, 0, 1, 1], [], []>} : vector<8x128xbf16>, vector<128x128xbf16>, vector<8x128xf32> -> vector<8x128xf32>
    %c0_27 = arith.constant 0 : index
    %c0_28 = arith.constant 0 : index
    %102 = vector.load %arg8[%c0_27, %c0_28] : memref<1x128xf32, #tpu.memory_space<vmem>>, vector<1x128xf32>
    %103 = vector.broadcast %102 : vector<1x128xf32> to vector<8x128xf32>
    %104 = arith.addf %101, %103 : vector<8x128xf32>
    %105 = arith.truncf %104 : vector<8x128xf32> to vector<8x128xbf16>
    %c0_29 = arith.constant 0 : index
    %c0_30 = arith.constant 0 : index
    %106 = vector.load %arg9[%c0_29, %c0_30] : memref<8x128xbf16, #tpu.memory_space<vmem>>, vector<8x128xbf16>
    tpu.vector_store %arg9[%c0_29, %c0_30], %105 {strides = array<i32>} : memref<8x128xbf16, #tpu.memory_space<vmem>>, vector<8x128xbf16>,
    return
  }
  func.func @transform_0(%arg0: i32) -> i32 {
    %c0_i32 = arith.constant 0 : i32
    %c0_i32_0 = arith.constant 0 : i32
    return %c0_i32 : i32
  }
  func.func @transform_1(%arg0: i32) -> (i32, i32) {
    %c0_i32 = arith.constant 0 : i32
    %c0_i32_0 = arith.constant 0 : i32
    return %arg0, %c0_i32 : i32, i32
  }
  func.func @transform_2(%arg0: i32) -> (i32, i32) {
    %c0_i32 = arith.constant 0 : i32
    %c0_i32_0 = arith.constant 0 : i32
    %c0_i32_1 = arith.constant 0 : i32
    return %c0_i32, %c0_i32_0 : i32, i32
  }
  func.func @transform_3(%arg0: i32) -> (i32, i32) {
    %c0_i32 = arith.constant 0 : i32
    %c0_i32_0 = arith.constant 0 : i32
    %c0_i32_1 = arith.constant 0 : i32
    return %c0_i32, %c0_i32_0 : i32, i32
  }
  func.func @transform_4(%arg0: i32) -> (i32, i32) {
    %c0_i32 = arith.constant 0 : i32
    %c0_i32_0 = arith.constant 0 : i32
    %c0_i32_1 = arith.constant 0 : i32
    return %c0_i32, %c0_i32_0 : i32, i32
  }
  func.func @transform_5(%arg0: i32) -> (i32, i32) {
    %c0_i32 = arith.constant 0 : i32
    %c0_i32_0 = arith.constant 0 : i32
    %c0_i32_1 = arith.constant 0 : i32
    return %c0_i32, %c0_i32_0 : i32, i32
  }
  func.func @transform_6(%arg0: i32) -> (i32, i32) {
    %c0_i32 = arith.constant 0 : i32
    %c0_i32_0 = arith.constant 0 : i32
    %c0_i32_1 = arith.constant 0 : i32
    return %c0_i32, %c0_i32_0 : i32, i32
  }
  func.func @transform_7(%arg0: i32) -> (i32, i32) {
    %c0_i32 = arith.constant 0 : i32
    %c0_i32_0 = arith.constant 0 : i32
    %c0_i32_1 = arith.constant 0 : i32
    return %c0_i32, %c0_i32_0 : i32, i32
  }
  func.func @transform_8(%arg0: i32) -> (i32, i32) {
    %c0_i32 = arith.constant 0 : i32
    %c0_i32_0 = arith.constant 0 : i32
    return %arg0, %c0_i32 : i32, i32
  }
}

</mosaic_0001>

<llo_original>
// kernel: tpu_custom_call.1
$region0: #{tpu_custom_call.1}
  #allocation0 [shape = 'u32[]', space=smem, size = 0x4, offset = 0x4, fixed_abs, tag = 'smem constant byte address 0x4 - core index']
  #allocation1 [shape = 'u32[144,128]{1,0:T(1,128)}', space=vmem, size = 0x12000, scoped, tag = 'internal scratch']
  %s0 = inlined_call_operand.hbm [shape: f32[2], index: 0, kind: input, shape index: {}]
  %s1 = inlined_call_operand.hbm [shape: f32[8,9], index: 1, kind: input, shape index: {}]
  %s2 = inlined_call_operand.hbm [shape: bf16[48,128], index: 2, kind: input, shape index: {}]
  %s3 = inlined_call_operand.vmem [shape: f32[5,128], index: 3, kind: input, shape index: {}]
  %s4 = inlined_call_operand.vmem [shape: f32[1,128], index: 4, kind: input, shape index: {}]
  %s5 = inlined_call_operand.vmem [shape: f32[1,128], index: 5, kind: input, shape index: {}]
  %s6 = inlined_call_operand.hbm [shape: bf16[128,128], index: 6, kind: input, shape index: {}]
  %s7 = inlined_call_operand.vmem [shape: f32[1,128], index: 7, kind: input, shape index: {}]
  %s8 = inlined_call_operand.hbm [shape: bf16[8,128], index: 8, kind: output, shape index: {}]
  %s9 = sld [smem:[#allocation0]]
  $region58: #{tpu_custom_call.1} parent=0
    _
  %s11 = ssub.s32 1, %s9
  %s12 = scalar_select 0, %s11, %s9
  $region1: #{tpu_custom_call.1} parent=0
    #allocation2 [shape = 'u8[512]{0}', space=smem, size = 0x200, scoped, tag = 'input window, operand 0, single buffered']
    #allocation3 [shape = 's32[1]{0}', space=sflag, size = 0x4, scoped, tag = 'scoped memory for tpu_custom_call.1']
    #allocation4 [shape = 's32[1]{0}', space=sflag, size = 0x4, scoped, tag = 'scoped memory for tpu_custom_call.1']
    #allocation5 [shape = 's32[1]{0}', space=sflag, size = 0x4, scoped, tag = 'scoped memory for tpu_custom_call.1']
    #allocation6 [shape = 'u8[4096]{0}', space=vmem, size = 0x1000, scoped, tag = 'input window, operand 1, single buffered']
    #allocation7 [shape = 'u8[12288]{0}', space=vmem, size = 0x3000, scoped, tag = 'input window, operand 2, single buffered']
    #allocation8 [shape = 's32[1]{0}', space=sflag, size = 0x4, scoped, tag = 'scoped memory for tpu_custom_call.1']
    #allocation9 [shape = 'u8[32768]{0}', space=vmem, size = 0x8000, scoped, tag = 'input window, operand 6, single buffered']
    #allocation10 [shape = 'u8[2048]{0}', space=vmem, size = 0x800, scoped, tag = 'output window, operand 0, single buffered']
    %13 = vsyncpa [#allocation5], 0
    %14 = vsyncpa [#allocation3], 0
    %15 = vsyncpa [#allocation8], 0
    %16 = vsyncpa [#allocation4], 0
    // Predicated region
    $region2: #{tpu_custom_call.1} parent=1 // pred_check
      _
    $region3: #{tpu_custom_call.1} parent=1 // pred_check_branch
      %18 = sbr.rel (0) target = $region5
    $region4: #{tpu_custom_call.1} parent=1 // pred_region
      %s20 = ssub.s32 16, 16
      %21 = vsyncadd [#allocation5], %s20
      %24 = dma.hbm_to_smem %s0, 16, [#allocation2], [#allocation5]
    $region5: #{tpu_custom_call.1} parent=1 // pred_fallthru
      _
    // Predicated region
    $region6: #{tpu_custom_call.1} parent=1 // pred_check
      _
    $region7: #{tpu_custom_call.1} parent=1 // pred_check_branch
      %26 = sbr.rel (0) target = $region9
    $region8: #{tpu_custom_call.1} parent=1 // pred_region
      %s28 = ssub.s32 128, 128
      %29 = vsyncadd [#allocation3], %s28
      %s31 = sshll.u32 [#allocation6], 4
      %s32 = int_to_ptr.vmem [resolvable:$true] %s31
      %34 = dma.hbm_to_vmem [thread:$0]  %s1, 128, %s32, [#allocation3]
    $region9: #{tpu_custom_call.1} parent=1 // pred_fallthru
      _
    // Predicated region
    $region10: #{tpu_custom_call.1} parent=1 // pred_check
      _
    $region11: #{tpu_custom_call.1} parent=1 // pred_check_branch
      %36 = sbr.rel (0) target = $region13
    $region12: #{tpu_custom_call.1} parent=1 // pred_region
      %s38 = ssub.s32 384, 384
      %39 = vsyncadd [#allocation8], %s38
      %s40 = sshll.u32 [#allocation7], 4
      %s41 = int_to_ptr.vmem [resolvable:$true] %s40
      %46 = dma.hbm_to_vmem [thread:$0]  %s2, 384, %s41, [#allocation8], 64, 64, 4
    $region13: #{tpu_custom_call.1} parent=1 // pred_fallthru
      _
    // Predicated region
    $region14: #{tpu_custom_call.1} parent=1 // pred_check
      _
    $region15: #{tpu_custom_call.1} parent=1 // pred_check_branch
      %48 = sbr.rel (0) target = $region17
    $region16: #{tpu_custom_call.1} parent=1 // pred_region
      _
    $region17: #{tpu_custom_call.1} parent=1 // pred_fallthru
      _
    // Predicated region
    $region18: #{tpu_custom_call.1} parent=1 // pred_check
      _
    $region19: #{tpu_custom_call.1} parent=1 // pred_check_branch
      %50 = sbr.rel (0) target = $region21
    $region20: #{tpu_custom_call.1} parent=1 // pred_region
      _
    $region21: #{tpu_custom_call.1} parent=1 // pred_fallthru
      _
    // Predicated region
    $region22: #{tpu_custom_call.1} parent=1 // pred_check
      _
    $region23: #{tpu_custom_call.1} parent=1 // pred_check_branch
      %52 = sbr.rel (0) target = $region25
    $region24: #{tpu_custom_call.1} parent=1 // pred_region
      _
    $region25: #{tpu_custom_call.1} parent=1 // pred_fallthru
      _
    // Predicated region
    $region26: #{tpu_custom_call.1} parent=1 // pred_check
      _
    $region27: #{tpu_custom_call.1} parent=1 // pred_check_branch
      %54 = sbr.rel (0) target = $region29
    $region28: #{tpu_custom_call.1} parent=1 // pred_region
      %s56 = ssub.s32 1024, 1024
      %57 = vsyncadd [#allocation8], %s56
      %s58 = sshll.u32 [#allocation9], 4
      %s59 = int_to_ptr.vmem [resolvable:$true] %s58
      %64 = dma.hbm_to_vmem [thread:$0]  %s6, 1024, %s59, [#allocation8], 64, 64, 4
    $region29: #{tpu_custom_call.1} parent=1 // pred_fallthru
      _
    // Predicated region
    $region30: #{tpu_custom_call.1} parent=1 // pred_check
      _
    $region31: #{tpu_custom_call.1} parent=1 // pred_check_branch
      %66 = sbr.rel (0) target = $region33
    $region32: #{tpu_custom_call.1} parent=1 // pred_region
      _
    $region33: #{tpu_custom_call.1} parent=1 // pred_fallthru
      _
    // Predicated region
    $region34: #{tpu_custom_call.1} parent=1 // pred_check
      _
    $region35: #{tpu_custom_call.1} parent=1 // pred_check_branch
      %68 = sbr.rel (0) target = $region37
    $region36: #{tpu_custom_call.1} parent=1 // pred_region
      %69 = dma.done [#allocation5], 16
    $region37: #{tpu_custom_call.1} parent=1 // pred_fallthru
      _
    // Predicated region
    $region38: #{tpu_custom_call.1} parent=1 // pred_check
      _
    $region39: #{tpu_custom_call.1} parent=1 // pred_check_branch
      %71 = sbr.rel (0) target = $region41
    $region40: #{tpu_custom_call.1} parent=1 // pred_region
      %72 = dma.done [#allocation3], 128
    $region41: #{tpu_custom_call.1} parent=1 // pred_fallthru
      _
    // Predicated region
    $region42: #{tpu_custom_call.1} parent=1 // pred_check
      _
    $region43: #{tpu_custom_call.1} parent=1 // pred_check_branch
      %74 = sbr.rel (0) target = $region45
    $region44: #{tpu_custom_call.1} parent=1 // pred_region
      %75 = dma.done [#allocation8], 384
    $region45: #{tpu_custom_call.1} parent=1 // pred_fallthru
      _
    // Predicated region
    $region46: #{tpu_custom_call.1} parent=1 // pred_check
      _
    $region47: #{tpu_custom_call.1} parent=1 // pred_check_branch
      %77 = sbr.rel (0) target = $region49
    $region48: #{tpu_custom_call.1} parent=1 // pred_region
      %78 = dma.done [#allocation8], 1024
    $region49: #{tpu_custom_call.1} parent=1 // pred_fallthru
      _
    %79 = sfence
    %v81 = vld [vmem:[#allocation6] sm:$0xff]
    %vm82 = vcmp.ne.f32.partialorder %v81, %v81
    %v83 = vsel %vm82, 0.0, %v81
    %vm84 = vcmp.eq.f32.partialorder %v83, inf
    %v85 = vsel %vm84, 3.4028235e+38, %v83
    %vm86 = vcmp.eq.f32.partialorder %v85, -inf
    %v87 = vsel %vm86, -3.4028235e+38, %v85
    %s88 = sld [smem:[#allocation2]]
    %s89 = sld [smem:[#allocation2 + $0x1]]
    %v90 = vstv %s89
    %v91 = vmul.f32 %v90, %v87
    %v92 = vand.u32 2147483647, %v91
    %vm93 = vcmp.le.f32.partialorder %v92, 0.7853982
    %vm94 = vcmp.lt.s32.totalorder %v91, 0
    %v95 = vand.u32 %v91, 2139095040
    %v96 = vshrl.u32 %v95, 23
    %v97 = vsub.s32 %v96, 127
    %v98 = vand.u32 2147483647, %v91
    %v99 = vand.u32 %v98, 8388607
    %v100 = vor.u32 %v99, 8388608
    %v101 = vsub.s32 0, %v100
    %v102 = vadd.s32 %v97, 1
    %vm103 = vcmp.gt.s32.totalorder %v102, 0
    %v104 = vsel %vm103, %v102, 0
    %v105 = vshrl.u32 %v104, 5
    %v106 = vand.u32 %v104, 31
    %v107 = vsub.s32 32, %v106
    %v108 = vshrl.u32 683565275, %v107
    %v109 = vshll.u32 683565275, %v106
    %v110 = vshrl.u32 2475754826, %v107
    %v111 = vor.u32 %v109, %v110
    %v112 = vshll.u32 2475754826, %v106
    %v113 = vshrl.u32 2131351028, %v107
    %v114 = vor.u32 %v112, %v113
    %v115 = vshll.u32 2131351028, %v106
    %v116 = vshrl.u32 2102212464, %v107
    %v117 = vor.u32 %v115, %v116
    %v118 = vshll.u32 2102212464, %v106
    %v119 = vshrl.u32 920167782, %v107
    %v120 = vor.u32 %v118, %v119
    %v121 = vshll.u32 920167782, %v106
    %v122 = vshrl.u32 1326507024, %v107
    %v123 = vor.u32 %v121, %v122
    %vm124 = vcmp.lt.s32.totalorder %v105, 1
    %vm125 = vcmp.lt.s32.totalorder %v105, 2
    %vm126 = vcmp.lt.s32.totalorder %v105, 3
    %vm127 = vcmp.lt.s32.totalorder %v105, 4
    %v128 = vsel %vm124, %v108, %v111
    %v129 = vsel %vm127, %v117, 2102212464
    %v130 = vsel %vm126, %v114, %v129
    %v131 = vsel %vm125, %v128, %v130
    %v132 = vsel %vm124, %v111, %v114
    %v133 = vsel %vm127, %v120, 920167782
    %v134 = vsel %vm126, %v117, %v133
    %v135 = vsel %vm125, %v132, %v134
    %v136 = vsel %vm124, %v114, %v117
    %v137 = vsel %vm127, %v123, 1326507024
    %v138 = vsel %vm126, %v120, %v137
    %v139 = vsel %vm125, %v136, %v138
    %v140 = vshll.u32 %v100, 8
    %v141 = vmul.u32.u64.compose %v140, %v139
    %v142 = vextract.low.u32 %v141
    %v143 = vextract.high.u32 %v141
    %v144 = vmul.u32.u64.compose %v140, %v135
    %v145 = vextract.low.u32 %v144
    %v146 = vextract.high.u32 %v144
    %v147 = vmul.u32 %v140, %v131
    %v148 = vadd.s32 %v143, %v145
    %vm149 = vc.u32 %v143, %v145
    %v150 = vadd.s32 %v146, 1
    %v151 = vsel %vm149, %v150, %v146
    %v152 = vadd.s32 %v147, %v151
    %v153 = vadd.s32 %v152, 536870912
    %v154 = vshrl.u32 %v153, 30
    %v155 = vshll.u32 %v154, 30
    %v156 = vsub.s32 %v152, %v155
    %vm157 = vcmp.lt.s32.totalorder %v156, 0
    %v158 = vsub.s32 0, %v156
    %v159 = vsel %vm157, %v158, %v156
    %v160 = vclz %v159
    %v161 = vsub.s32 %v160, 2
    %vm162 = vcmp.gt.s32.totalorder 0, %v161
    %v163 = vsel %vm162, 0, %v161
    %v164 = vsub.s32 32, %v163
    %v165 = vshll.u32 %v156, %v163
    %v166 = vshrl.u32 %v148, %v164
    %v167 = vor.u32 %v165, %v166
    %v168 = vsub.s32 4294967266, %v163
    %v169 = vadd.s32 %v168, 127
    %v170 = vshll.u32 %v169, 23
    %v171 = vor.u32 4788187, %v170
    %v172 = vand.u32 2147483647, %v171
    %v174 = vcvt.s32.f32 %v167
    %v175 = vmul.f32 %v174, %v172
    %v176 = vxor.u32 %v175, 2147483648
    %v177 = vsel %vm94, %v176, %v175
    %v178 = vsub.s32 4, %v154
    %v179 = vsel %vm94, %v178, %v154
    %v180 = vsel %vm93, %v91, %v177
    %v181 = vsel %vm93, 0, %v179
    %v182 = vcosq.f32.pop %v180
    %v183 = vsinq.f32.pop %v180
    %vm184 = vweird.f32 %v91
    %v185 = vand.u32 %v181, 3
    %vm186 = vcmp.lt.s32.totalorder %v185, 2
    %vm187 = vcmp.eq.s32.totalorder %v185, 0
    %v188 = vxor.u32 %v183, 2147483648
    %v189 = vsel %vm187, %v182, %v188
    %vm190 = vcmp.eq.s32.totalorder %v185, 2
    %v191 = vxor.u32 %v182, 2147483648
    %v192 = vsel %vm190, %v191, %v183
    %v193 = vsel %vm186, %v189, %v192
    %v194 = vsel %vm184, nan, %v193
    %v195 = vstv %s88
    %v196 = vmul.f32 %v195, %v194
    %s197 = ssub.f32 1.0, %s88
    %v198 = vstv %s197
    %v199 = vmul.f32 %v198, %v87
    %v200 = vadd.f32 %v196, %v199
    %v201 = vld [vmem:[%s5] sm:$0x1]
    %v202 = vld [vmem:[%s4] sm:$0x1]
    %204 = vset.pattern.permute.xlu0 5
    %205 = vperm.xlu0 %204, %v200
    %v206 = vpop.permute.xlu0 %205
    %v209 = vlaneseq
    %v210 = vshrl.u32 %v209, 7
    %v211 = vsub.s32 0, %v210
    %v212 = vrot.slane %v202, %v211
    %v214 = vmul.f32 %v206, %v212
    %v216 = vlaneseq
    %v217 = vshrl.u32 %v216, 7
    %v218 = vsub.s32 0, %v217
    %v219 = vrot.slane %v201, %v218
    %v221 = vadd.f32 %v219, %v214
    %v222 = vld [vmem:[%s3] sm:$0x1f]
    %224 = vset.pattern.permute.xlu0 0
    %225 = vperm.xlu0 %224, %v87
    %v226 = vpop.permute.xlu0 %225
    %v228 = vlaneseq
    %v229 = vshrl.u32 %v228, 7
    %v230 = vsub.s32 0, %v229
    %v231 = vrot.slane %v222, %v230
    %v232 = vmul.f32 %v226, %v231
    %v233 = vadd.f32 %v221, %v232
    %234 = vset.pattern.permute.xlu0 1
    %235 = vperm.xlu0 %234, %v87
    %v236 = vpop.permute.xlu0 %235
    %v238 = vlaneseq
    %v239 = vshrl.u32 %v238, 7
    %v240 = vsub.s32 1, %v239
    %v241 = vrot.slane %v222, %v240
    %v242 = vmul.f32 %v236, %v241
    %v243 = vadd.f32 %v233, %v242
    %244 = vset.pattern.permute.xlu0 2
    %245 = vperm.xlu0 %244, %v87
    %v246 = vpop.permute.xlu0 %245
    %v248 = vlaneseq
    %v249 = vshrl.u32 %v248, 7
    %v250 = vsub.s32 2, %v249
    %v251 = vrot.slane %v222, %v250
    %v252 = vmul.f32 %v246, %v251
    %v253 = vadd.f32 %v243, %v252
    %254 = vset.pattern.permute.xlu0 3
    %255 = vperm.xlu0 %254, %v87
    %v256 = vpop.permute.xlu0 %255
    %v258 = vlaneseq
    %v259 = vshrl.u32 %v258, 7
    %v260 = vsub.s32 3, %v259
    %v261 = vrot.slane %v222, %v260
    %v262 = vmul.f32 %v256, %v261
    %v263 = vadd.f32 %v253, %v262
    %264 = vset.pattern.permute.xlu0 4
    %265 = vperm.xlu0 %264, %v87
    %v266 = vpop.permute.xlu0 %265
    %v268 = vlaneseq
    %v269 = vshrl.u32 %v268, 7
    %v270 = vsub.s32 4, %v269
    %v271 = vrot.slane %v222, %v270
    %v272 = vmul.f32 %v266, %v271
    %v273 = vadd.f32 %v263, %v272
    %v274 = vcvt.f32.s32.to.zero.pseudo %v81
    %v275 = vlaneseq
    %v276 = vand.u32 %v275, 127
    %277 = vset.pattern.permute.xlu0 6
    %278 = vperm.xlu0 %277, %v274
    %v279 = vpop.permute.xlu0 %278
    %vm280 = vcmp.eq.s32.totalorder %v276, %v279
    %v281 = vadd.s32 %v274, 16
    %282 = vset.pattern.permute.xlu0 7
    %283 = vperm.xlu0 %282, %v281
    %v284 = vpop.permute.xlu0 %283
    %vm285 = vcmp.eq.s32.totalorder %v276, %v284
    %vm286 = vmor %vm280, %vm285
    %v287 = vadd.s32 %v274, 32
    %288 = vset.pattern.permute.xlu0 8
    %289 = vperm.xlu0 %288, %v287
    %v290 = vpop.permute.xlu0 %289
    %vm291 = vcmp.eq.s32.totalorder %v276, %v290
    %vm292 = vmor %vm286, %vm291
    %v293 = vsel %vm292, 1, 0
    %v294 = vcvt.s32.f32 %v293
    %v295 = vpack.c.bf16 %v294, %v294
    %v296 = vld [vmem:[#allocation7] sm:$0xf]
    %v297 = vld [vmem:[#allocation7 + $0x4] sm:$0xf]
    %v298 = vld [vmem:[#allocation7 + $0x8] sm:$0xf]
    %v299 = vld [vmem:[#allocation7 + $0xc] sm:$0xf]
    %v300 = vld [vmem:[#allocation7 + $0x10] sm:$0xf]
    %v301 = vld [vmem:[#allocation7 + $0x14] sm:$0xf]
    %v308 = vunpack.c.l.b16 %v296
    %v309 = vunpack.c.l.b16 %v297
    %v310 = vunpack.c.l.b16 %v298
    %v311 = vunpack.c.l.b16 %v299
    %v312 = vunpack.c.l.b16 %v300
    %v313 = vunpack.c.l.b16 %v301
    %v314 = vpack.c.b16 %v309, %v308
    %v315 = vpack.c.b16 %v311, %v310
    %v316 = vpack.c.b16 %v313, %v312
    %vm320 = vcmask 392192
    %v322 = vsel %vm320, %v295, 0
    %324 = vmatprep.subr.bf16.mxu0 0
    %325 = vmatpush1.bf16.msra.mxu0 %v314
    %326 = vmatprep.subr.bf16.mxu0 0
    %327 = vmatpush1.bf16.msra.mxu0 %v315
    %328 = vmatprep.subr.bf16.mxu0 0
    %329 = vmatpush1.bf16.msra.mxu0 %v316
    %330 = vmatprep.subr.bf16.mxu0 0
    %331 = vmatpush1.bf16.msra.mxu0 0
    %332 = vmatprep.subr.bf16.mxu0 0
    %333 = vmatpush1.bf16.msra.mxu0 0
    %334 = vmatprep.subr.bf16.mxu0 0
    %335 = vmatpush1.bf16.msra.mxu0 0
    %336 = vmatprep.subr.bf16.mxu0 0
    %337 = vmatpush1.bf16.msra.mxu0 0
    %338 = vmatprep.subr.bf16.mxu0 0
    %339 = vmatpush1.bf16.msra.mxu0 0
    %340 = vmatprep.subr.bf16.mxu0 0
    %341 = vmatpush1.bf16.msra.mxu0 0
    %342 = vmatprep.subr.bf16.mxu0 0
    %343 = vmatpush1.bf16.msra.mxu0 0
    %344 = vmatprep.subr.bf16.mxu0 0
    %345 = vmatpush1.bf16.msra.mxu0 0
    %346 = vmatprep.subr.bf16.mxu0 0
    %347 = vmatpush1.bf16.msra.mxu0 0
    %348 = vmatprep.subr.bf16.mxu0 0
    %349 = vmatpush1.bf16.msra.mxu0 0
    %350 = vmatprep.subr.bf16.mxu0 0
    %351 = vmatpush1.bf16.msra.mxu0 0
    %352 = vmatprep.subr.bf16.mxu0 0
    %353 = vmatpush1.bf16.msra.mxu0 0
    %354 = vmatprep.subr.bf16.mxu0 0
    %355 = vmatpush1.bf16.msra.mxu0 0
    %356 = vmatprep.mubr.bf16.mxu0 0
    %357 = vmatmul.mubr.bf16.gmra.mrb[0].mxu0 %v322
    %v358 = vpop.f32.mrb[0].mxu0
    %v359 = vadd.f32 0.0, %v358
    %v360 = vpop.f32.mrb[0].mxu0
    %v361 = vpop.f32.mrb[0].mxu0
    %v362 = vpop.f32.mrb[0].mxu0
    %363 = vdwg.mxu0
    %v364 = vadd.f32 %v273, %v359
    %v365 = vmax.f32 %v364, 0.0
    %v366 = vpack.c.bf16 %v365, %v365
    %v367 = vld [vmem:[#allocation9] sm:$0xf]
    %v368 = vld [vmem:[#allocation9 + $0x4] sm:$0xf]
    %v369 = vld [vmem:[#allocation9 + $0x8] sm:$0xf]
    %v370 = vld [vmem:[#allocation9 + $0xc] sm:$0xf]
    %v371 = vld [vmem:[#allocation9 + $0x10] sm:$0xf]
    %v372 = vld [vmem:[#allocation9 + $0x14] sm:$0xf]
    %v373 = vld [vmem:[#allocation9 + $0x18] sm:$0xf]
    %v374 = vld [vmem:[#allocation9 + $0x1c] sm:$0xf]
    %v375 = vld [vmem:[#allocation9 + $0x20] sm:$0xf]
    %v376 = vld [vmem:[#allocation9 + $0x24] sm:$0xf]
    %v377 = vld [vmem:[#allocation9 + $0x28] sm:$0xf]
    %v378 = vld [vmem:[#allocation9 + $0x2c] sm:$0xf]
    %v379 = vld [vmem:[#allocation9 + $0x30] sm:$0xf]
    %v380 = vld [vmem:[#allocation9 + $0x34] sm:$0xf]
    %v381 = vld [vmem:[#allocation9 + $0x38] sm:$0xf]
    %v382 = vld [vmem:[#allocation9 + $0x3c] sm:$0xf]
    %v383 = vld [vmem:[%s7] sm:$0x1]
    %v385 = vlaneseq
    %v386 = vshrl.u32 %v385, 7
    %v387 = vsub.s32 0, %v386
    %v388 = vrot.slane %v383, %v387
    %v406 = vunpack.c.l.b16 %v367
    %v407 = vunpack.c.l.b16 %v368
    %v408 = vunpack.c.l.b16 %v369
    %v409 = vunpack.c.l.b16 %v370
    %v410 = vunpack.c.l.b16 %v371
    %v411 = vunpack.c.l.b16 %v372
    %v412 = vunpack.c.l.b16 %v373
    %v413 = vunpack.c.l.b16 %v374
    %v414 = vunpack.c.l.b16 %v375
    %v415 = vunpack.c.l.b16 %v376
    %v416 = vunpack.c.l.b16 %v377
    %v417 = vunpack.c.l.b16 %v378
    %v418 = vunpack.c.l.b16 %v379
    %v419 = vunpack.c.l.b16 %v380
    %v420 = vunpack.c.l.b16 %v381
    %v421 = vunpack.c.l.b16 %v382
    %v422 = vpack.c.b16 %v407, %v406
    %v423 = vpack.c.b16 %v409, %v408
    %v424 = vpack.c.b16 %v411, %v410
    %v425 = vpack.c.b16 %v413, %v412
    %v426 = vpack.c.b16 %v415, %v414
    %v427 = vpack.c.b16 %v417, %v416
    %v428 = vpack.c.b16 %v419, %v418
    %v429 = vpack.c.b16 %v421, %v420
    %438 = vmatprep.subr.bf16.mxu0 0
    %439 = vmatpush1.bf16.msra.mxu0 %v422
    %440 = vmatprep.subr.bf16.mxu0 0
    %441 = vmatpush1.bf16.msra.mxu0 %v423
    %442 = vmatprep.subr.bf16.mxu0 0
    %443 = vmatpush1.bf16.msra.mxu0 %v424
    %444 = vmatprep.subr.bf16.mxu0 0
    %445 = vmatpush1.bf16.msra.mxu0 %v425
    %446 = vmatprep.subr.bf16.mxu0 0
    %447 = vmatpush1.bf16.msra.mxu0 %v426
    %448 = vmatprep.subr.bf16.mxu0 0
    %449 = vmatpush1.bf16.msra.mxu0 %v427
    %450 = vmatprep.subr.bf16.mxu0 0
    %451 = vmatpush1.bf16.msra.mxu0 %v428
    %452 = vmatprep.subr.bf16.mxu0 0
    %453 = vmatpush1.bf16.msra.mxu0 %v429
    %454 = vmatprep.subr.bf16.mxu0 0
    %455 = vmatpush1.bf16.msra.mxu0 0
    %456 = vmatprep.subr.bf16.mxu0 0
    %457 = vmatpush1.bf16.msra.mxu0 0
    %458 = vmatprep.subr.bf16.mxu0 0
    %459 = vmatpush1.bf16.msra.mxu0 0
    %460 = vmatprep.subr.bf16.mxu0 0
    %461 = vmatpush1.bf16.msra.mxu0 0
    %462 = vmatprep.subr.bf16.mxu0 0
    %463 = vmatpush1.bf16.msra.mxu0 0
    %464 = vmatprep.subr.bf16.mxu0 0
    %465 = vmatpush1.bf16.msra.mxu0 0
    %466 = vmatprep.subr.bf16.mxu0 0
    %467 = vmatpush1.bf16.msra.mxu0 0
    %468 = vmatprep.subr.bf16.mxu0 0
    %469 = vmatpush1.bf16.msra.mxu0 0
    %470 = vmatprep.mubr.bf16.mxu0 0
    %471 = vmatmul.mubr.bf16.gmra.mrb[0].mxu0 %v366
    %v472 = vpop.f32.mrb[0].mxu0
    %v473 = vadd.f32 %v388, %v472
    %v474 = vpop.f32.mrb[0].mxu0
    %v475 = vpop.f32.mrb[0].mxu0
    %v476 = vpop.f32.mrb[0].mxu0
    %477 = vdwg.mxu0
    %v478 = vpack.c.bf16 %v473, %v473
    %479 = vst [vmem:[#allocation10] sm:$0xf] %v478
    // Predicated region
    $region50: #{tpu_custom_call.1} parent=1 // pred_check
      _
    $region51: #{tpu_custom_call.1} parent=1 // pred_check_branch
      %481 = sbr.rel (0) target = $region53
    $region52: #{tpu_custom_call.1} parent=1 // pred_region
      %s483 = ssub.s32 64, 64
      %484 = vsyncadd [#allocation4], %s483
      %s486 = sshll.u32 [#allocation10], 4
      %s487 = int_to_ptr.vmem [resolvable:$true] %s486
      %489 = dma.vmem_to_hbm [thread:$0]  %s487, 64, %s8, [#allocation4]
    $region53: #{tpu_custom_call.1} parent=1 // pred_fallthru
      _
    // Predicated region
    $region54: #{tpu_custom_call.1} parent=1 // pred_check
      _
    $region55: #{tpu_custom_call.1} parent=1 // pred_check_branch
      %491 = sbr.rel (0) target = $region57
    $region56: #{tpu_custom_call.1} parent=1 // pred_region
      %492 = dma.done [#allocation4], 64
    $region57: #{tpu_custom_call.1} parent=1 // pred_fallthru
      _
    %493 = vsyncpa [#allocation3], 1
    %494 = vsyncpa [#allocation8], 1
    %495 = vsyncpa [#allocation4], 1
    %496 = vsyncpa [#allocation5], 1

</llo_original>
